<compile_context>
chip_gen: v6e
topology: v6e:2x2x1
jax: 0.10.0
libtpu: 0.0.40
codegen_flags: <defaults>
</compile_context>

<pallas_src>
import functools

import jax
import jax.numpy as jnp
from jax.experimental import pallas as pl
from jax.experimental.pallas import tpu as pltpu

IN_DIM = 187
HIDDEN = 64           # logical hidden size (matches the PyTorch module)
HIDDEN_PAD = 128      # lane-dense padded hidden size used inside the kernel
OUT_DIM = 5


def _round_up(x, m):
    return (x + m - 1) // m * m


def mlp_kernel(x_ref, w1_ref, b1_ref, w2_ref, b2_ref, o_ref):
    # Layer 1: Linear(187 -> 128 padded) + ReLU  (MXU matmul, VPU elementwise).
    x = x_ref[...].astype(jnp.float32)
    h = jnp.dot(x, w1_ref[...], preferred_element_type=jnp.float32) + b1_ref[...]
    h = jnp.maximum(h, 0.0)
    # Layer 2: Linear(128 padded -> 5) + Sigmoid (padded rows of W2 are zero).
    z = jnp.dot(h, w2_ref[...], preferred_element_type=jnp.float32) + b2_ref[...]
    o_ref[...] = jax.nn.sigmoid(z).astype(o_ref.dtype)


@functools.partial(jax.jit, static_argnames=())
def mlp_forward(x, w1, b1, w2, b2):
    """x: (B, 187) f32; w1: (187, 64); b1: (64,) or (1, 64); w2: (64, 5); b2: (5,) or (1, 5).

    Returns sigmoid(relu(x @ w1 + b1) @ w2 + b2).squeeze()  (matches torch forward).
    """
    B = x.shape[0]

    # ---- Batch tiling: multiple of 8, capped at 1024 rows per tile. ----------
    TILE_B = min(1024, _round_up(B, 8))
    B_pad = _round_up(B, TILE_B)
    if B_pad != B:
        x = jnp.pad(x, ((0, B_pad - B), (0, 0)))
    n_tiles = B_pad // TILE_B

    # ---- Zero-pad hidden dim 64 -> 128 so activations are lane-dense. --------
    b1 = jnp.reshape(b1, (1, HIDDEN))
    b2 = jnp.reshape(b2, (1, OUT_DIM))
    w1p = jnp.pad(w1.astype(jnp.float32), ((0, 0), (0, HIDDEN_PAD - HIDDEN)))
    b1p = jnp.pad(b1.astype(jnp.float32), ((0, 0), (0, HIDDEN_PAD - HIDDEN)))
    w2p = jnp.pad(w2.astype(jnp.float32), ((0, HIDDEN_PAD - HIDDEN), (0, 0)))
    b2p = b2.astype(jnp.float32)

    # ---- VMEM budget: double-buffered x/out tiles + resident weights. --------
    tile_bytes = TILE_B * IN_DIM * 4 + TILE_B * OUT_DIM * 4
    weight_bytes = (IN_DIM * HIDDEN_PAD + HIDDEN_PAD + HIDDEN_PAD * OUT_DIM + OUT_DIM) * 4
    vmem_limit = _round_up(4 * tile_bytes + 4 * weight_bytes + (2 << 20), 1 << 20)

    cost = pl.CostEstimate(
        flops=2 * B_pad * (IN_DIM * HIDDEN_PAD + HIDDEN_PAD * OUT_DIM),
        transcendentals=B_pad * OUT_DIM,               # sigmoid -> exp
        bytes_accessed=B_pad * (IN_DIM + OUT_DIM) * 4 + weight_bytes,
    )

    out = pl.pallas_call(
        mlp_kernel,
        out_shape=jax.ShapeDtypeStruct((B_pad, OUT_DIM), jnp.float32),
        grid_spec=pltpu.PrefetchScalarGridSpec(
            num_scalar_prefetch=0,
            grid=(n_tiles,),
            in_specs=[
                pl.BlockSpec((TILE_B, IN_DIM), lambda i: (i, 0)),      # streamed x
                pl.BlockSpec((IN_DIM, HIDDEN_PAD), lambda i: (0, 0)),  # resident W1
                pl.BlockSpec((1, HIDDEN_PAD), lambda i: (0, 0)),       # resident b1
                pl.BlockSpec((HIDDEN_PAD, OUT_DIM), lambda i: (0, 0)), # resident W2
                pl.BlockSpec((1, OUT_DIM), lambda i: (0, 0)),          # resident b2
            ],
            out_specs=pl.BlockSpec((TILE_B, OUT_DIM), lambda i: (i, 0)),
        ),
        compiler_params=pltpu.CompilerParams(
            dimension_semantics=("parallel",),          # megacore sharding on v7x
            vmem_limit_bytes=vmem_limit,
        ),
        cost_estimate=cost,
    )(x, w1p, b1p, w2p, b2p)

    out = out[:B]
    # torch's .squeeze(): drop all size-1 dims (shape (5,) when B == 1).
    return jnp.squeeze(out)


def init_params(key):
    """Deterministic init mimicking torch.nn.Linear default (U[-1/sqrt(fan_in), +])."""
    k1, k2, k3, k4 = jax.random.split(key, 4)
    bound1 = 1.0 / jnp.sqrt(float(IN_DIM))
    bound2 = 1.0 / jnp.sqrt(float(HIDDEN))
    w1 = jax.random.uniform(k1, (IN_DIM, HIDDEN), jnp.float32, -bound1, bound1)
    b1 = jax.random.uniform(k2, (1, HIDDEN), jnp.float32, -bound1, bound1)
    w2 = jax.random.uniform(k3, (HIDDEN, OUT_DIM), jnp.float32, -bound2, bound2)
    b2 = jax.random.uniform(k4, (1, OUT_DIM), jnp.float32, -bound2, bound2)
    return w1, b1, w2, b2


if __name__ == "__main__":
    key = jax.random.PRNGKey(0)
    kx, kp = jax.random.split(key)
    B = 2
    x = jax.random.normal(kx, (B, IN_DIM), jnp.float32)
    w1, b1, w2, b2 = init_params(kp)

    out = mlp_forward(x, w1, b1, w2, b2)
    out = jax.block_until_ready(out)

    # Reference check in plain JAX (unpadded weights).
    ref = jax.nn.sigmoid(jnp.maximum(x @ w1 + b1, 0.0) @ w2 + b2)
    ref = jnp.squeeze(ref)
    assert out.shape == ref.shape == (B, OUT_DIM)
    assert jnp.allclose(out, ref, atol=1e-5, rtol=1e-5)

    # Also exercise a batch that is not a multiple of the tile size.
    B2 = 37
    x2 = jax.random.normal(kx, (B2, IN_DIM), jnp.float32)
    out2 = jax.block_until_ready(mlp_forward(x2, w1, b1, w2, b2))
    ref2 = jnp.squeeze(jax.nn.sigmoid(jnp.maximum(x2 @ w1 + b1, 0.0) @ w2 + b2))
    assert out2.shape == ref2.shape == (B2, OUT_DIM)
    assert jnp.allclose(out2, ref2, atol=1e-5, rtol=1e-5)

    print("KERNEL_OK")
</pallas_src>

<mosaic_0001>
module attributes {stable_mosaic.version = 11 : i64} {
  func.func @mlp_kernel(%arg0: i32, %arg1: memref<8x187xf32, #tpu.memory_space<vmem>>, %arg2: memref<187x128xf32, #tpu.memory_space<vmem>>, %arg3: memref<1x128xf32, #tpu.memory_space<vmem>>, %arg4: memref<128x5xf32, #tpu.memory_space<vmem>>, %arg5: memref<1x5xf32, #tpu.memory_space<vmem>>, %arg6: memref<8x5xf32, #tpu.memory_space<vmem>>) attributes {dimension_semantics = [#tpu.dimension_semantics<parallel>], iteration_bounds = array<i64: 1>, scalar_prefetch = 0 : i64, scratch_operands = 0 : i64, tpu.core_type = #tpu.core_type<tc>, window_params = [{transform_indices = @transform_0, window_bounds = array<i64: 8, 187>}, {pipeline_mode = #tpu.pipeline_mode<synchronous>, transform_indices = @transform_1, window_bounds = array<i64: 187, 128>}, {pipeline_mode = #tpu.pipeline_mode<synchronous>, transform_indices = @transform_2, window_bounds = array<i64: 1, 128>}, {pipeline_mode = #tpu.pipeline_mode<synchronous>, transform_indices = @transform_3, window_bounds = array<i64: 128, 5>}, {pipeline_mode = #tpu.pipeline_mode<synchronous>, transform_indices = @transform_4, window_bounds = array<i64: 1, 5>}, {transform_indices = @transform_5, window_bounds = array<i64: 8, 5>}]} {
    %c0 = arith.constant 0 : index
    %c0_0 = arith.constant 0 : index
    %0 = vector.load %arg1[%c0, %c0_0] : memref<8x187xf32, #tpu.memory_space<vmem>>, vector<8x187xf32>
    %c0_1 = arith.constant 0 : index
    %c0_2 = arith.constant 0 : index
    %1 = vector.load %arg2[%c0_1, %c0_2] : memref<187x128xf32, #tpu.memory_space<vmem>>, vector<187x128xf32>
    %cst = arith.constant dense<0.000000e+00> : vector<8x128xf32>
    %2 = tpu.matmul %0, %1, %cst {dimension_numbers = #tpu.dot_dimension_numbers<[1], [0], [0], [1], [0, 0, 1, 1], [], []>} : vector<8x187xf32>, vector<187x128xf32>, vector<8x128xf32> -> vector<8x128xf32>
    %c0_3 = arith.constant 0 : index
    %c0_4 = arith.constant 0 : index
    %3 = vector.load %arg3[%c0_3, %c0_4] : memref<1x128xf32, #tpu.memory_space<vmem>>, vector<1x128xf32>
    %4 = vector.broadcast %3 : vector<1x128xf32> to vector<8x128xf32>
    %5 = arith.addf %2, %4 : vector<8x128xf32>
    %cst_5 = arith.constant 0.000000e+00 : f32
    %6 = vector.broadcast %cst_5 : f32 to vector<8x128xf32>
    %7 = arith.maximumf %5, %6 : vector<8x128xf32>
    %c0_6 = arith.constant 0 : index
    %c0_7 = arith.constant 0 : index
    %8 = vector.load %arg4[%c0_6, %c0_7] : memref<128x5xf32, #tpu.memory_space<vmem>>, vector<128x5xf32>
    %cst_8 = arith.constant dense<0.000000e+00> : vector<8x5xf32>
    %9 = tpu.matmul %7, %8, %cst_8 {dimension_numbers = #tpu.dot_dimension_numbers<[1], [0], [0], [1], [0, 0, 1, 1], [], []>} : vector<8x128xf32>, vector<128x5xf32>, vector<8x5xf32> -> vector<8x5xf32>
    %c0_9 = arith.constant 0 : index
    %c0_10 = arith.constant 0 : index
    %10 = vector.load %arg5[%c0_9, %c0_10] : memref<1x5xf32, #tpu.memory_space<vmem>>, vector<1x5xf32>
    %11 = vector.broadcast %10 : vector<1x5xf32> to vector<8x5xf32>
    %12 = arith.addf %9, %11 : vector<8x5xf32>
    %13 = arith.negf %12 : vector<8x5xf32>
    %14 = math.exp %13 : vector<8x5xf32>
    %cst_11 = arith.constant 1.000000e+00 : f32
    %15 = vector.broadcast %cst_11 : f32 to vector<8x5xf32>
    %16 = arith.addf %15, %14 : vector<8x5xf32>
    %17 = arith.divf %15, %16 : vector<8x5xf32>
    %c0_12 = arith.constant 0 : index
    %c0_13 = arith.constant 0 : index
    %18 = vector.load %arg6[%c0_12, %c0_13] : memref<8x5xf32, #tpu.memory_space<vmem>>, vector<8x5xf32>
    tpu.vector_store %arg6[%c0_12, %c0_13], %17 {strides = array<i32>} : memref<8x5xf32, #tpu.memory_space<vmem>>, vector<8x5xf32>,
    return
  }
  func.func @transform_0(%arg0: i32) -> (i32, i32) {
    %c0_i32 = arith.constant 0 : i32
    %c0_i32_0 = arith.constant 0 : i32
    return %arg0, %c0_i32 : i32, i32
  }
  func.func @transform_1(%arg0: i32) -> (i32, i32) {
    %c0_i32 = arith.constant 0 : i32
    %c0_i32_0 = arith.constant 0 : i32
    %c0_i32_1 = arith.constant 0 : i32
    return %c0_i32, %c0_i32_0 : i32, i32
  }
  func.func @transform_2(%arg0: i32) -> (i32, i32) {
    %c0_i32 = arith.constant 0 : i32
    %c0_i32_0 = arith.constant 0 : i32
    %c0_i32_1 = arith.constant 0 : i32
    return %c0_i32, %c0_i32_0 : i32, i32
  }
  func.func @transform_3(%arg0: i32) -> (i32, i32) {
    %c0_i32 = arith.constant 0 : i32
    %c0_i32_0 = arith.constant 0 : i32
    %c0_i32_1 = arith.constant 0 : i32
    return %c0_i32, %c0_i32_0 : i32, i32
  }
  func.func @transform_4(%arg0: i32) -> (i32, i32) {
    %c0_i32 = arith.constant 0 : i32
    %c0_i32_0 = arith.constant 0 : i32
    %c0_i32_1 = arith.constant 0 : i32
    return %c0_i32, %c0_i32_0 : i32, i32
  }
  func.func @transform_5(%arg0: i32) -> (i32, i32) {
    %c0_i32 = arith.constant 0 : i32
    %c0_i32_0 = arith.constant 0 : i32
    return %arg0, %c0_i32 : i32, i32
  }
}

</mosaic_0001>

<llo_original>
// kernel: mlp_forward.1
$region0: #{mlp_forward.1}
  #allocation0 [shape = 'u32[]', space=smem, size = 0x4, offset = 0x4, fixed_abs, tag = 'smem constant byte address 0x4 - core index']
  #allocation1 [shape = 'u32[144,128]{1,0:T(1,128)}', space=vmem, size = 0x12000, scoped, tag = 'internal scratch']
  %s0 = inlined_call_operand.vmem [shape: f32[8,187], index: 0, kind: input, shape index: {}]
  %s1 = inlined_call_operand.vmem [shape: f32[187,128], index: 1, kind: input, shape index: {}]
  %s2 = inlined_call_operand.vmem [shape: f32[1,128], index: 2, kind: input, shape index: {}]
  %s3 = inlined_call_operand.vmem [shape: f32[128,5], index: 3, kind: input, shape index: {}]
  %s4 = inlined_call_operand.vmem [shape: f32[1,5], index: 4, kind: input, shape index: {}]
  %s5 = inlined_call_operand.vmem [shape: f32[8,5], index: 5, kind: output, shape index: {}]
  %s6 = sld [smem:[#allocation0]]
  $region30: #{mlp_forward.1} parent=0
    _
  %s8 = ssub.s32 1, %s6
  %s9 = scalar_select 0, %s8, %s6
  // Predicated region
  $region2: #{mlp_forward.1} parent=0 // pred_check
    _
  $region3: #{mlp_forward.1} parent=0 // pred_check_branch
    %11 = sbr.rel (0) target = $region5
  $region4: #{mlp_forward.1} parent=0 // pred_region
    _
  $region5: #{mlp_forward.1} parent=0 // pred_fallthru
    _
  // Predicated region
  $region6: #{mlp_forward.1} parent=0 // pred_check
    _
  $region7: #{mlp_forward.1} parent=0 // pred_check_branch
    %13 = sbr.rel (0) target = $region9
  $region8: #{mlp_forward.1} parent=0 // pred_region
    _
  $region9: #{mlp_forward.1} parent=0 // pred_fallthru
    _
  // Predicated region
  $region10: #{mlp_forward.1} parent=0 // pred_check
    _
  $region11: #{mlp_forward.1} parent=0 // pred_check_branch
    %15 = sbr.rel (0) target = $region13
  $region12: #{mlp_forward.1} parent=0 // pred_region
    _
  $region13: #{mlp_forward.1} parent=0 // pred_fallthru
    _
  // Predicated region
  $region14: #{mlp_forward.1} parent=0 // pred_check
    _
  $region15: #{mlp_forward.1} parent=0 // pred_check_branch
    %17 = sbr.rel (0) target = $region17
  $region16: #{mlp_forward.1} parent=0 // pred_region
    _
  $region17: #{mlp_forward.1} parent=0 // pred_fallthru
    _
  // Predicated region
  $region18: #{mlp_forward.1} parent=0 // pred_check
    _
  $region19: #{mlp_forward.1} parent=0 // pred_check_branch
    %19 = sbr.rel (0) target = $region21
  $region20: #{mlp_forward.1} parent=0 // pred_region
    _
  $region21: #{mlp_forward.1} parent=0 // pred_fallthru
    _
  %v20 = vld [vmem:[%s0] sm:$0xff]
  %v21 = vld [vmem:[%s0 + $0x8] sm:$0xff]
  %v22 = vld [vmem:[%s1] sm:$0xff]
  %v23 = vld [vmem:[%s1 + $0x8] sm:$0xff]
  %v24 = vld [vmem:[%s1 + $0x10] sm:$0xff]
  %v25 = vld [vmem:[%s1 + $0x18] sm:$0xff]
  %v26 = vld [vmem:[%s1 + $0x20] sm:$0xff]
  %v27 = vld [vmem:[%s1 + $0x28] sm:$0xff]
  %v28 = vld [vmem:[%s1 + $0x30] sm:$0xff]
  %v29 = vld [vmem:[%s1 + $0x38] sm:$0xff]
  %v30 = vld [vmem:[%s1 + $0x40] sm:$0xff]
  %v31 = vld [vmem:[%s1 + $0x48] sm:$0xff]
  %v32 = vld [vmem:[%s1 + $0x50] sm:$0xff]
  %v33 = vld [vmem:[%s1 + $0x58] sm:$0xff]
  %v34 = vld [vmem:[%s1 + $0x60] sm:$0xff]
  %v35 = vld [vmem:[%s1 + $0x68] sm:$0xff]
  %v36 = vld [vmem:[%s1 + $0x70] sm:$0xff]
  %v37 = vld [vmem:[%s1 + $0x78] sm:$0xff]
  %v38 = vld [vmem:[%s1 + $0x80] sm:$0xff]
  %v39 = vld [vmem:[%s1 + $0x88] sm:$0xff]
  %v40 = vld [vmem:[%s1 + $0x90] sm:$0xff]
  %v41 = vld [vmem:[%s1 + $0x98] sm:$0xff]
  %v42 = vld [vmem:[%s1 + $0xa0] sm:$0xff]
  %v43 = vld [vmem:[%s1 + $0xa8] sm:$0xff]
  %v44 = vld [vmem:[%s1 + $0xb0] sm:$0xff]
  %v45 = vld [vmem:[%s1 + $0xb8] sm:$0x7]
  %v46 = vld [vmem:[%s2] sm:$0x1]
  %v48 = vlaneseq
  %v49 = vshrl.u32 %v48, 7
  %v50 = vsub.s32 0, %v49
  %v51 = vrot.slane %v46, %v50
  %vm53 = vcmask 482304
  %v55 = vsel %vm53, %v21, 0
  %vm57 = vcmask 1042432
  %v59 = vsel %vm57, %v45, 0
  %61 = vmatprep.subr.mxu0 0.0
  %62 = vmatpush1.msra.mxu0 %v37
  %63 = vmatprep.subr.mxu0 0.0
  %64 = vmatpush1.msra.mxu0 %v36
  %65 = vmatprep.subr.mxu0 0.0
  %66 = vmatpush1.msra.mxu0 %v35
  %67 = vmatprep.subr.mxu0 0.0
  %68 = vmatpush1.msra.mxu0 %v34
  %69 = vmatprep.subr.mxu0 0.0
  %70 = vmatpush1.msra.mxu0 %v33
  %71 = vmatprep.subr.mxu0 0.0
  %72 = vmatpush1.msra.mxu0 %v32
  %73 = vmatprep.subr.mxu0 0.0
  %74 = vmatpush1.msra.mxu0 %v31
  %75 = vmatprep.subr.mxu0 0.0
  %76 = vmatpush1.msra.mxu0 %v30
  %77 = vmatprep.subr.mxu0 0.0
  %78 = vmatpush1.msra.mxu0 %v29
  %79 = vmatprep.subr.mxu0 0.0
  %80 = vmatpush1.msra.mxu0 %v28
  %81 = vmatprep.subr.mxu0 0.0
  %82 = vmatpush1.msra.mxu0 %v27
  %83 = vmatprep.subr.mxu0 0.0
  %84 = vmatpush1.msra.mxu0 %v26
  %85 = vmatprep.subr.mxu0 0.0
  %86 = vmatpush1.msra.mxu0 %v25
  %87 = vmatprep.subr.mxu0 0.0
  %88 = vmatpush1.msra.mxu0 %v24
  %89 = vmatprep.subr.mxu0 0.0
  %90 = vmatpush1.msra.mxu0 %v23
  %91 = vmatprep.subr.mxu0 0.0
  %92 = vmatpush1.msra.mxu0 %v22
  %93 = vmatprep.subr.mxu0 0.0
  %94 = vmatpush2.msra.mxu0 0.0
  %95 = vmatprep.subr.mxu0 0.0
  %96 = vmatpush2.msra.mxu0 0.0
  %97 = vmatprep.subr.mxu0 0.0
  %98 = vmatpush2.msra.mxu0 0.0
  %99 = vmatprep.subr.mxu0 0.0
  %100 = vmatpush2.msra.mxu0 0.0
  %101 = vmatprep.subr.mxu0 0.0
  %102 = vmatpush2.msra.mxu0 0.0
  %103 = vmatprep.subr.mxu0 0.0
  %104 = vmatpush2.msra.mxu0 0.0
  %105 = vmatprep.subr.mxu0 0.0
  %106 = vmatpush2.msra.mxu0 0.0
  %107 = vmatprep.subr.mxu0 0.0
  %108 = vmatpush2.msra.mxu0 0.0
  %109 = vmatprep.subr.mxu0 0.0
  %110 = vmatpush2.msra.mxu0 %v59
  %111 = vmatprep.subr.mxu0 0.0
  %112 = vmatpush2.msra.mxu0 %v44
  %113 = vmatprep.subr.mxu0 0.0
  %114 = vmatpush2.msra.mxu0 %v43
  %115 = vmatprep.subr.mxu0 0.0
  %116 = vmatpush2.msra.mxu0 %v42
  %117 = vmatprep.subr.mxu0 0.0
  %118 = vmatpush2.msra.mxu0 %v41
  %119 = vmatprep.subr.mxu0 0.0
  %120 = vmatpush2.msra.mxu0 %v40
  %121 = vmatprep.subr.mxu0 0.0
  %122 = vmatpush2.msra.mxu0 %v39
  %123 = vmatprep.subr.mxu0 0.0
  %124 = vmatpush2.msra.mxu0 %v38
  %125 = vmatprep.mubr.f32.mxu0 %v55
  %126 = vmatmul.mubr.f32.gmra.mxu0 %v20
  %v127 = vpop.f32.mrf.mxu0
  %v128 = vadd.f32 %v51, %v127
  %v129 = vpop.f32.mrf.mxu0
  %130 = vdwg.mxu0
  %v131 = vmax.f32 %v128, 0.0
  %v132 = vld [vmem:[%s3] sm:$0xff]
  %v133 = vld [vmem:[%s3 + $0x8] sm:$0xff]
  %v134 = vld [vmem:[%s3 + $0x10] sm:$0xff]
  %v135 = vld [vmem:[%s3 + $0x18] sm:$0xff]
  %v136 = vld [vmem:[%s3 + $0x20] sm:$0xff]
  %v137 = vld [vmem:[%s3 + $0x28] sm:$0xff]
  %v138 = vld [vmem:[%s3 + $0x30] sm:$0xff]
  %v139 = vld [vmem:[%s3 + $0x38] sm:$0xff]
  %v140 = vld [vmem:[%s3 + $0x40] sm:$0xff]
  %v141 = vld [vmem:[%s3 + $0x48] sm:$0xff]
  %v142 = vld [vmem:[%s3 + $0x50] sm:$0xff]
  %v143 = vld [vmem:[%s3 + $0x58] sm:$0xff]
  %v144 = vld [vmem:[%s3 + $0x60] sm:$0xff]
  %v145 = vld [vmem:[%s3 + $0x68] sm:$0xff]
  %v146 = vld [vmem:[%s3 + $0x70] sm:$0xff]
  %v147 = vld [vmem:[%s3 + $0x78] sm:$0xff]
  %v148 = vld [vmem:[%s4] sm:$0x1]
  %v150 = vlaneseq
  %v151 = vshrl.u32 %v150, 7
  %v152 = vsub.s32 0, %v151
  %v153 = vrot.slane %v148, %v152
  %155 = vmatprep.subr.mxu0 0.0
  %156 = vmatpush1.msra.mxu0 %v147
  %157 = vmatprep.subr.mxu0 0.0
  %158 = vmatpush1.msra.mxu0 %v146
  %159 = vmatprep.subr.mxu0 0.0
  %160 = vmatpush1.msra.mxu0 %v145
  %161 = vmatprep.subr.mxu0 0.0
  %162 = vmatpush1.msra.mxu0 %v144
  %163 = vmatprep.subr.mxu0 0.0
  %164 = vmatpush1.msra.mxu0 %v143
  %165 = vmatprep.subr.mxu0 0.0
  %166 = vmatpush1.msra.mxu0 %v142
  %167 = vmatprep.subr.mxu0 0.0
  %168 = vmatpush1.msra.mxu0 %v141
  %169 = vmatprep.subr.mxu0 0.0
  %170 = vmatpush1.msra.mxu0 %v140
  %171 = vmatprep.subr.mxu0 0.0
  %172 = vmatpush1.msra.mxu0 %v139
  %173 = vmatprep.subr.mxu0 0.0
  %174 = vmatpush1.msra.mxu0 %v138
  %175 = vmatprep.subr.mxu0 0.0
  %176 = vmatpush1.msra.mxu0 %v137
  %177 = vmatprep.subr.mxu0 0.0
  %178 = vmatpush1.msra.mxu0 %v136
  %179 = vmatprep.subr.mxu0 0.0
  %180 = vmatpush1.msra.mxu0 %v135
  %181 = vmatprep.subr.mxu0 0.0
  %182 = vmatpush1.msra.mxu0 %v134
  %183 = vmatprep.subr.mxu0 0.0
  %184 = vmatpush1.msra.mxu0 %v133
  %185 = vmatprep.subr.mxu0 0.0
  %186 = vmatpush1.msra.mxu0 %v132
  %187 = vmatprep.subr.mxu0 0.0
  %188 = vmatpush2.msra.mxu0 0.0
  %189 = vmatprep.subr.mxu0 0.0
  %190 = vmatpush2.msra.mxu0 0.0
  %191 = vmatprep.subr.mxu0 0.0
  %192 = vmatpush2.msra.mxu0 0.0
  %193 = vmatprep.subr.mxu0 0.0
  %194 = vmatpush2.msra.mxu0 0.0
  %195 = vmatprep.subr.mxu0 0.0
  %196 = vmatpush2.msra.mxu0 0.0
  %197 = vmatprep.subr.mxu0 0.0
  %198 = vmatpush2.msra.mxu0 0.0
  %199 = vmatprep.subr.mxu0 0.0
  %200 = vmatpush2.msra.mxu0 0.0
  %201 = vmatprep.subr.mxu0 0.0
  %202 = vmatpush2.msra.mxu0 0.0
  %203 = vmatprep.subr.mxu0 0.0
  %204 = vmatpush2.msra.mxu0 0.0
  %205 = vmatprep.subr.mxu0 0.0
  %206 = vmatpush2.msra.mxu0 0.0
  %207 = vmatprep.subr.mxu0 0.0
  %208 = vmatpush2.msra.mxu0 0.0
  %209 = vmatprep.subr.mxu0 0.0
  %210 = vmatpush2.msra.mxu0 0.0
  %211 = vmatprep.subr.mxu0 0.0
  %212 = vmatpush2.msra.mxu0 0.0
  %213 = vmatprep.subr.mxu0 0.0
  %214 = vmatpush2.msra.mxu0 0.0
  %215 = vmatprep.subr.mxu0 0.0
  %216 = vmatpush2.msra.mxu0 0.0
  %217 = vmatprep.subr.mxu0 0.0
  %218 = vmatpush2.msra.mxu0 0.0
  %219 = vmatprep.mubr.f32.mxu0 0.0
  %220 = vmatmul.mubr.f32.gmra.mxu0 %v131
  %v221 = vpop.f32.mrf.mxu0
  %v222 = vadd.f32 %v153, %v221
  %v223 = vpop.f32.mrf.mxu0
  %224 = vdwg.mxu0
  %v225 = vxor.u32 %v222, 2147483648
  %v226 = vmul.f32 %v225, 1.442695
  %v227 = vpow.pop %v226
  %v228 = vadd.f32 %v227, 1.0
  %v229 = vrcp.pop %v228
  %v230 = vmul.f32 1.0, %v229
  %vm231 = vcmask 39936
  %232 = vst.msk [vmem:[%s5] sm:$0xff] %vm231, %v230
  // Predicated region
  $region22: #{mlp_forward.1} parent=0 // pred_check
    _
  $region23: #{mlp_forward.1} parent=0 // pred_check_branch
    %234 = sbr.rel (0) target = $region25
  $region24: #{mlp_forward.1} parent=0 // pred_region
    _
  $region25: #{mlp_forward.1} parent=0 // pred_fallthru
    _
  // Predicated region
  $region26: #{mlp_forward.1} parent=0 // pred_check
    _
  $region27: #{mlp_forward.1} parent=0 // pred_check_branch
    %236 = sbr.rel (0) target = $region29
  $region28: #{mlp_forward.1} parent=0 // pred_region
    _
  $region29: #{mlp_forward.1} parent=0 // pred_fallthru
    _

</llo_original>
